<compile_context>
chip_gen: v7x
topology: tpu7x:2x2x1
jax: 0.10.0
libtpu: 0.0.40
codegen_flags: <defaults>
</compile_context>

<pallas_src>
import jax
import jax.numpy as jnp
from jax import lax
from jax.experimental import pallas as pl
from jax.experimental.pallas import tpu as pltpu


def _round_up(x, m):
    return (x + m - 1) // m * m


def _make_ce_kernel(dims, offsets, b_actual, tb):
    """Build the kernel with static split layout baked in (loop unrolls)."""
    n_splits = len(dims)

    def kernel(x_ref, t_ref, out_ref):
        b = pl.program_id(0)
        x = x_ref[...].astype(jnp.float32)      # (TB, C) logits
        t = t_ref[...]                          # (TB, n_splits) int32 targets
        TB, C = x.shape

        col = lax.broadcasted_iota(jnp.int32, (TB, C), 1)
        row = lax.broadcasted_iota(jnp.int32, (TB, 1), 0) + b * tb
        valid = row < b_actual                  # mask padded batch rows

        total = jnp.zeros((), jnp.float32)
        for i in range(n_splits):               # static unroll over splits
            off, d = offsets[i], dims[i]
            seg = (col >= off) & (col < off + d)
            # -1e30 on out-of-split lanes: exp underflows to exactly 0.
            xs = jnp.where(seg, x, -1e30)
            mx = jnp.max(xs, axis=-1, keepdims=True)                       # (TB,1)
            lse = jnp.log(jnp.sum(jnp.exp(xs - mx), axis=-1,
                                  keepdims=True)) + mx                     # (TB,1)
            gt = t[:, i:i + 1] + off            # global column of target class
            sel = jnp.sum(jnp.where(col == gt, x, 0.0), axis=-1,
                          keepdims=True)                                   # (TB,1)
            total = total + jnp.sum(jnp.where(valid, lse - sel, 0.0))

        # Lane-dense partial-sum output (128-wide, unmasked store).
        out_ref[...] = jnp.full((1, 1, 128), total, dtype=jnp.float32)

    return kernel


def ce_loss_pallas(output, target, outputs_dimension_per_outputs, tb_max=512):
    """CELoss forward. output: (B, C_total), target: (B, n_splits) ints."""
    dims = [int(d) for d in outputs_dimension_per_outputs]
    n_splits = len(dims)
    offsets = [sum(dims[:i]) for i in range(n_splits)]
    B, C = output.shape
    assert C == sum(dims), "channel dim must equal sum of split dims"

    target = target.astype(jnp.int32)

    # Batch tile: multiple of 8, capped; pad batch (cheap) only if needed.
    tb = min(_round_up(tb_max, 8), _round_up(B, 8))
    b_pad = _round_up(B, tb)
    if b_pad != B:
        output = jnp.pad(output, ((0, b_pad - B), (0, 0)))
        target = jnp.pad(target, ((0, b_pad - B), (0, 0)))
    num_tiles = b_pad // tb

    kernel = _make_ce_kernel(dims, offsets, B, tb)

    partial = pl.pallas_call(
        kernel,
        out_shape=jax.ShapeDtypeStruct((num_tiles, 1, 128), jnp.float32),
        grid_spec=pltpu.PrefetchScalarGridSpec(
            num_scalar_prefetch=0,
            grid=(num_tiles,),
            in_specs=[
                pl.BlockSpec((tb, C), lambda b: (b, 0)),          # logits tile
                pl.BlockSpec((tb, n_splits), lambda b: (b, 0)),   # targets tile
            ],
            out_specs=pl.BlockSpec((1, 1, 128), lambda b: (b, 0, 0)),
        ),
        compiler_params=pltpu.CompilerParams(
            dimension_semantics=("parallel",),   # batch tiles -> both TCs on v7x
        ),
    )(output, target)

    # Every lane of a tile's output holds the same partial sum: take lane 0.
    return jnp.sum(partial[:, 0, 0]) / (n_splits * B)


def ce_loss_reference(output, target, outputs_dimension_per_outputs):
    """Pure-JAX reference matching the PyTorch module."""
    dims = list(outputs_dimension_per_outputs)
    index2split = [sum(dims[:i]) for i in range(len(dims) + 1)]
    loss = 0.0
    for i in range(len(dims)):
        seg = output[:, index2split[i]:index2split[i + 1]].astype(jnp.float32)
        logp = jax.nn.log_softmax(seg, axis=-1)
        tgt = target[:, i]
        nll = -jnp.take_along_axis(logp, tgt[:, None], axis=-1)[:, 0]
        loss = loss + jnp.mean(nll)
    return loss / len(dims)


def _make_inputs(key, B, dims):
    k1, k2 = jax.random.split(key)
    output = jax.random.normal(k1, (B, sum(dims)), dtype=jnp.float32)
    tkeys = jax.random.split(k2, len(dims))
    target = jnp.stack(
        [jax.random.randint(tkeys[i], (B,), 0, dims[i]) for i in range(len(dims))],
        axis=1,
    ).astype(jnp.int32)
    return output, target


if __name__ == "__main__":
    key = jax.random.PRNGKey(0)
    outputs_dimension_per_outputs = [6, 10, 12, 8]   # C_total = 36

    # Case 1: single batch tile (B = 8).
    out1, tgt1 = _make_inputs(key, 8, outputs_dimension_per_outputs)
    loss1 = jax.block_until_ready(
        ce_loss_pallas(out1, tgt1, outputs_dimension_per_outputs))
    ref1 = ce_loss_reference(out1, tgt1, outputs_dimension_per_outputs)
    assert jnp.allclose(loss1, ref1, rtol=1e-5, atol=1e-5), (loss1, ref1)

    # Case 2: multiple parallel batch tiles + padded rows (B = 20, tile = 8).
    out2, tgt2 = _make_inputs(jax.random.PRNGKey(1), 20,
                              outputs_dimension_per_outputs)
    loss2 = jax.block_until_ready(
        ce_loss_pallas(out2, tgt2, outputs_dimension_per_outputs, tb_max=8))
    ref2 = ce_loss_reference(out2, tgt2, outputs_dimension_per_outputs)
    assert jnp.allclose(loss2, ref2, rtol=1e-5, atol=1e-5), (loss2, ref2)

    print("KERNEL_OK")
</pallas_src>

<mosaic_0001>
module attributes {stable_mosaic.version = 11 : i64} {
  func.func @kernel(%arg0: i32, %arg1: memref<8x36xf32, #tpu.memory_space<vmem>>, %arg2: memref<8x4xi32, #tpu.memory_space<vmem>>, %arg3: memref<1x1x128xf32, #tpu.memory_space<vmem>>) attributes {dimension_semantics = [#tpu.dimension_semantics<parallel>], iteration_bounds = array<i64: 1>, scalar_prefetch = 0 : i64, scratch_operands = 0 : i64, tpu.core_type = #tpu.core_type<tc>, window_params = [{transform_indices = @transform_0, window_bounds = array<i64: 8, 36>}, {transform_indices = @transform_1, window_bounds = array<i64: 8, 4>}, {transform_indices = @transform_2, window_bounds = array<i64: 1, 1, 128>}]} {
    %c0 = arith.constant 0 : index
    %c0_0 = arith.constant 0 : index
    %0 = vector.load %arg1[%c0, %c0_0] : memref<8x36xf32, #tpu.memory_space<vmem>>, vector<8x36xf32>
    %c0_1 = arith.constant 0 : index
    %c0_2 = arith.constant 0 : index
    %1 = vector.load %arg2[%c0_1, %c0_2] : memref<8x4xi32, #tpu.memory_space<vmem>>, vector<8x4xi32>
    %2 = tpu.iota {dimensions = array<i32: 1>} : vector<8x36xi32>
    %3 = tpu.iota {dimensions = array<i32: 0>} : vector<8x1xi32>
    %c8_i32 = arith.constant 8 : i32
    %4 = arith.muli %arg0, %c8_i32 : i32
    %5 = vector.broadcast %4 : i32 to vector<8x1xi32>
    %6 = arith.addi %3, %5 : vector<8x1xi32>
    %c8_i32_3 = arith.constant 8 : i32
    %7 = vector.broadcast %c8_i32_3 : i32 to vector<8x1xi32>
    %8 = arith.cmpi slt, %6, %7 : vector<8x1xi32>
    %c0_i32 = arith.constant 0 : i32
    %9 = vector.broadcast %c0_i32 : i32 to vector<8x36xi32>
    %10 = arith.cmpi sge, %2, %9 : vector<8x36xi32>
    %c6_i32 = arith.constant 6 : i32
    %11 = vector.broadcast %c6_i32 : i32 to vector<8x36xi32>
    %12 = arith.cmpi slt, %2, %11 : vector<8x36xi32>
    %13 = arith.andi %10, %12 : vector<8x36xi1>
    %cst = arith.constant -1.000000e+30 : f32
    %14 = vector.broadcast %cst : f32 to vector<8x36xf32>
    %15 = arith.select %13, %0, %14 : vector<8x36xi1>, vector<8x36xf32>
    %cst_4 = arith.constant dense<0xFF800000> : vector<8xf32>
    %16 = vector.multi_reduction <maximumf>, %15, %cst_4 [1] : vector<8x36xf32> to vector<8xf32>
    %17 = vector.shape_cast %16 : vector<8xf32> to vector<8x1xf32>
    %18 = vector.broadcast %17 : vector<8x1xf32> to vector<8x36xf32>
    %19 = arith.subf %15, %18 : vector<8x36xf32>
    %20 = math.exp %19 : vector<8x36xf32>
    %cst_5 = arith.constant dense<0.000000e+00> : vector<8xf32>
    %21 = vector.multi_reduction <add>, %20, %cst_5 [1] : vector<8x36xf32> to vector<8xf32>
    %22 = vector.shape_cast %21 : vector<8xf32> to vector<8x1xf32>
    %23 = math.log %22 : vector<8x1xf32>
    %24 = arith.addf %23, %17 : vector<8x1xf32>
    %25 = vector.extract_strided_slice %1 {offsets = [0, 0], sizes = [8, 1], strides = [1, 1]} : vector<8x4xi32> to vector<8x1xi32>
    %c0_i32_6 = arith.constant 0 : i32
    %26 = vector.broadcast %c0_i32_6 : i32 to vector<8x1xi32>
    %27 = arith.addi %25, %26 : vector<8x1xi32>
    %28 = vector.broadcast %27 : vector<8x1xi32> to vector<8x36xi32>
    %29 = arith.cmpi eq, %2, %28 : vector<8x36xi32>
    %cst_7 = arith.constant 0.000000e+00 : f32
    %30 = vector.broadcast %cst_7 : f32 to vector<8x36xf32>
    %31 = arith.select %29, %0, %30 : vector<8x36xi1>, vector<8x36xf32>
    %cst_8 = arith.constant dense<0.000000e+00> : vector<8xf32>
    %32 = vector.multi_reduction <add>, %31, %cst_8 [1] : vector<8x36xf32> to vector<8xf32>
    %33 = vector.shape_cast %32 : vector<8xf32> to vector<8x1xf32>
    %34 = arith.subf %24, %33 : vector<8x1xf32>
    %cst_9 = arith.constant 0.000000e+00 : f32
    %35 = vector.broadcast %cst_9 : f32 to vector<8x1xf32>
    %36 = arith.select %8, %34, %35 : vector<8x1xi1>, vector<8x1xf32>
    %37 = vector.shape_cast %36 : vector<8x1xf32> to vector<1x8x1xf32>
    %cst_10 = arith.constant dense<0.000000e+00> : vector<1xf32>
    %38 = vector.multi_reduction <add>, %37, %cst_10 [1, 2] : vector<1x8x1xf32> to vector<1xf32>
    %39 = vector.shape_cast %38 : vector<1xf32> to vector<1x1x1xf32>
    %40 = vector.extract %39[0, 0, 0] : f32 from vector<1x1x1xf32>
    %cst_11 = arith.constant 0.000000e+00 : f32
    %41 = arith.addf %cst_11, %40 : f32
    %c6_i32_12 = arith.constant 6 : i32
    %42 = vector.broadcast %c6_i32_12 : i32 to vector<8x36xi32>
    %43 = arith.cmpi sge, %2, %42 : vector<8x36xi32>
    %c16_i32 = arith.constant 16 : i32
    %44 = vector.broadcast %c16_i32 : i32 to vector<8x36xi32>
    %45 = arith.cmpi slt, %2, %44 : vector<8x36xi32>
    %46 = arith.andi %43, %45 : vector<8x36xi1>
    %cst_13 = arith.constant -1.000000e+30 : f32
    %47 = vector.broadcast %cst_13 : f32 to vector<8x36xf32>
    %48 = arith.select %46, %0, %47 : vector<8x36xi1>, vector<8x36xf32>
    %cst_14 = arith.constant dense<0xFF800000> : vector<8xf32>
    %49 = vector.multi_reduction <maximumf>, %48, %cst_14 [1] : vector<8x36xf32> to vector<8xf32>
    %50 = vector.shape_cast %49 : vector<8xf32> to vector<8x1xf32>
    %51 = vector.broadcast %50 : vector<8x1xf32> to vector<8x36xf32>
    %52 = arith.subf %48, %51 : vector<8x36xf32>
    %53 = math.exp %52 : vector<8x36xf32>
    %cst_15 = arith.constant dense<0.000000e+00> : vector<8xf32>
    %54 = vector.multi_reduction <add>, %53, %cst_15 [1] : vector<8x36xf32> to vector<8xf32>
    %55 = vector.shape_cast %54 : vector<8xf32> to vector<8x1xf32>
    %56 = math.log %55 : vector<8x1xf32>
    %57 = arith.addf %56, %50 : vector<8x1xf32>
    %58 = vector.extract_strided_slice %1 {offsets = [0, 1], sizes = [8, 1], strides = [1, 1]} : vector<8x4xi32> to vector<8x1xi32>
    %c6_i32_16 = arith.constant 6 : i32
    %59 = vector.broadcast %c6_i32_16 : i32 to vector<8x1xi32>
    %60 = arith.addi %58, %59 : vector<8x1xi32>
    %61 = vector.broadcast %60 : vector<8x1xi32> to vector<8x36xi32>
    %62 = arith.cmpi eq, %2, %61 : vector<8x36xi32>
    %cst_17 = arith.constant 0.000000e+00 : f32
    %63 = vector.broadcast %cst_17 : f32 to vector<8x36xf32>
    %64 = arith.select %62, %0, %63 : vector<8x36xi1>, vector<8x36xf32>
    %cst_18 = arith.constant dense<0.000000e+00> : vector<8xf32>
    %65 = vector.multi_reduction <add>, %64, %cst_18 [1] : vector<8x36xf32> to vector<8xf32>
    %66 = vector.shape_cast %65 : vector<8xf32> to vector<8x1xf32>
    %67 = arith.subf %57, %66 : vector<8x1xf32>
    %cst_19 = arith.constant 0.000000e+00 : f32
    %68 = vector.broadcast %cst_19 : f32 to vector<8x1xf32>
    %69 = arith.select %8, %67, %68 : vector<8x1xi1>, vector<8x1xf32>
    %70 = vector.shape_cast %69 : vector<8x1xf32> to vector<1x8x1xf32>
    %cst_20 = arith.constant dense<0.000000e+00> : vector<1xf32>
    %71 = vector.multi_reduction <add>, %70, %cst_20 [1, 2] : vector<1x8x1xf32> to vector<1xf32>
    %72 = vector.shape_cast %71 : vector<1xf32> to vector<1x1x1xf32>
    %73 = vector.extract %72[0, 0, 0] : f32 from vector<1x1x1xf32>
    %74 = arith.addf %41, %73 : f32
    %c16_i32_21 = arith.constant 16 : i32
    %75 = vector.broadcast %c16_i32_21 : i32 to vector<8x36xi32>
    %76 = arith.cmpi sge, %2, %75 : vector<8x36xi32>
    %c28_i32 = arith.constant 28 : i32
    %77 = vector.broadcast %c28_i32 : i32 to vector<8x36xi32>
    %78 = arith.cmpi slt, %2, %77 : vector<8x36xi32>
    %79 = arith.andi %76, %78 : vector<8x36xi1>
    %cst_22 = arith.constant -1.000000e+30 : f32
    %80 = vector.broadcast %cst_22 : f32 to vector<8x36xf32>
    %81 = arith.select %79, %0, %80 : vector<8x36xi1>, vector<8x36xf32>
    %cst_23 = arith.constant dense<0xFF800000> : vector<8xf32>
    %82 = vector.multi_reduction <maximumf>, %81, %cst_23 [1] : vector<8x36xf32> to vector<8xf32>
    %83 = vector.shape_cast %82 : vector<8xf32> to vector<8x1xf32>
    %84 = vector.broadcast %83 : vector<8x1xf32> to vector<8x36xf32>
    %85 = arith.subf %81, %84 : vector<8x36xf32>
    %86 = math.exp %85 : vector<8x36xf32>
    %cst_24 = arith.constant dense<0.000000e+00> : vector<8xf32>
    %87 = vector.multi_reduction <add>, %86, %cst_24 [1] : vector<8x36xf32> to vector<8xf32>
    %88 = vector.shape_cast %87 : vector<8xf32> to vector<8x1xf32>
    %89 = math.log %88 : vector<8x1xf32>
    %90 = arith.addf %89, %83 : vector<8x1xf32>
    %91 = vector.extract_strided_slice %1 {offsets = [0, 2], sizes = [8, 1], strides = [1, 1]} : vector<8x4xi32> to vector<8x1xi32>
    %c16_i32_25 = arith.constant 16 : i32
    %92 = vector.broadcast %c16_i32_25 : i32 to vector<8x1xi32>
    %93 = arith.addi %91, %92 : vector<8x1xi32>
    %94 = vector.broadcast %93 : vector<8x1xi32> to vector<8x36xi32>
    %95 = arith.cmpi eq, %2, %94 : vector<8x36xi32>
    %cst_26 = arith.constant 0.000000e+00 : f32
    %96 = vector.broadcast %cst_26 : f32 to vector<8x36xf32>
    %97 = arith.select %95, %0, %96 : vector<8x36xi1>, vector<8x36xf32>
    %cst_27 = arith.constant dense<0.000000e+00> : vector<8xf32>
    %98 = vector.multi_reduction <add>, %97, %cst_27 [1] : vector<8x36xf32> to vector<8xf32>
    %99 = vector.shape_cast %98 : vector<8xf32> to vector<8x1xf32>
    %100 = arith.subf %90, %99 : vector<8x1xf32>
    %cst_28 = arith.constant 0.000000e+00 : f32
    %101 = vector.broadcast %cst_28 : f32 to vector<8x1xf32>
    %102 = arith.select %8, %100, %101 : vector<8x1xi1>, vector<8x1xf32>
    %103 = vector.shape_cast %102 : vector<8x1xf32> to vector<1x8x1xf32>
    %cst_29 = arith.constant dense<0.000000e+00> : vector<1xf32>
    %104 = vector.multi_reduction <add>, %103, %cst_29 [1, 2] : vector<1x8x1xf32> to vector<1xf32>
    %105 = vector.shape_cast %104 : vector<1xf32> to vector<1x1x1xf32>
    %106 = vector.extract %105[0, 0, 0] : f32 from vector<1x1x1xf32>
    %107 = arith.addf %74, %106 : f32
    %c28_i32_30 = arith.constant 28 : i32
    %108 = vector.broadcast %c28_i32_30 : i32 to vector<8x36xi32>
    %109 = arith.cmpi sge, %2, %108 : vector<8x36xi32>
    %c36_i32 = arith.constant 36 : i32
    %110 = vector.broadcast %c36_i32 : i32 to vector<8x36xi32>
    %111 = arith.cmpi slt, %2, %110 : vector<8x36xi32>
    %112 = arith.andi %109, %111 : vector<8x36xi1>
    %cst_31 = arith.constant -1.000000e+30 : f32
    %113 = vector.broadcast %cst_31 : f32 to vector<8x36xf32>
    %114 = arith.select %112, %0, %113 : vector<8x36xi1>, vector<8x36xf32>
    %cst_32 = arith.constant dense<0xFF800000> : vector<8xf32>
    %115 = vector.multi_reduction <maximumf>, %114, %cst_32 [1] : vector<8x36xf32> to vector<8xf32>
    %116 = vector.shape_cast %115 : vector<8xf32> to vector<8x1xf32>
    %117 = vector.broadcast %116 : vector<8x1xf32> to vector<8x36xf32>
    %118 = arith.subf %114, %117 : vector<8x36xf32>
    %119 = math.exp %118 : vector<8x36xf32>
    %cst_33 = arith.constant dense<0.000000e+00> : vector<8xf32>
    %120 = vector.multi_reduction <add>, %119, %cst_33 [1] : vector<8x36xf32> to vector<8xf32>
    %121 = vector.shape_cast %120 : vector<8xf32> to vector<8x1xf32>
    %122 = math.log %121 : vector<8x1xf32>
    %123 = arith.addf %122, %116 : vector<8x1xf32>
    %124 = vector.extract_strided_slice %1 {offsets = [0, 3], sizes = [8, 1], strides = [1, 1]} : vector<8x4xi32> to vector<8x1xi32>
    %c28_i32_34 = arith.constant 28 : i32
    %125 = vector.broadcast %c28_i32_34 : i32 to vector<8x1xi32>
    %126 = arith.addi %124, %125 : vector<8x1xi32>
    %127 = vector.broadcast %126 : vector<8x1xi32> to vector<8x36xi32>
    %128 = arith.cmpi eq, %2, %127 : vector<8x36xi32>
    %cst_35 = arith.constant 0.000000e+00 : f32
    %129 = vector.broadcast %cst_35 : f32 to vector<8x36xf32>
    %130 = arith.select %128, %0, %129 : vector<8x36xi1>, vector<8x36xf32>
    %cst_36 = arith.constant dense<0.000000e+00> : vector<8xf32>
    %131 = vector.multi_reduction <add>, %130, %cst_36 [1] : vector<8x36xf32> to vector<8xf32>
    %132 = vector.shape_cast %131 : vector<8xf32> to vector<8x1xf32>
    %133 = arith.subf %123, %132 : vector<8x1xf32>
    %cst_37 = arith.constant 0.000000e+00 : f32
    %134 = vector.broadcast %cst_37 : f32 to vector<8x1xf32>
    %135 = arith.select %8, %133, %134 : vector<8x1xi1>, vector<8x1xf32>
    %136 = vector.shape_cast %135 : vector<8x1xf32> to vector<1x8x1xf32>
    %cst_38 = arith.constant dense<0.000000e+00> : vector<1xf32>
    %137 = vector.multi_reduction <add>, %136, %cst_38 [1, 2] : vector<1x8x1xf32> to vector<1xf32>
    %138 = vector.shape_cast %137 : vector<1xf32> to vector<1x1x1xf32>
    %139 = vector.extract %138[0, 0, 0] : f32 from vector<1x1x1xf32>
    %140 = arith.addf %107, %139 : f32
    %141 = vector.broadcast %140 : f32 to vector<1x1x128xf32>
    %c0_39 = arith.constant 0 : index
    %c0_40 = arith.constant 0 : index
    %c0_41 = arith.constant 0 : index
    %142 = vector.load %arg3[%c0_39, %c0_40, %c0_41] : memref<1x1x128xf32, #tpu.memory_space<vmem>>, vector<1x1x128xf32>
    tpu.vector_store %arg3[%c0_39, %c0_40, %c0_41], %141 {strides = array<i32>} : memref<1x1x128xf32, #tpu.memory_space<vmem>>, vector<1x1x128xf32>,
    return
  }
  func.func @transform_0(%arg0: i32) -> (i32, i32) {
    %c0_i32 = arith.constant 0 : i32
    %c0_i32_0 = arith.constant 0 : i32
    return %arg0, %c0_i32 : i32, i32
  }
  func.func @transform_1(%arg0: i32) -> (i32, i32) {
    %c0_i32 = arith.constant 0 : i32
    %c0_i32_0 = arith.constant 0 : i32
    return %arg0, %c0_i32 : i32, i32
  }
  func.func @transform_2(%arg0: i32) -> (i32, i32, i32) {
    %c0_i32 = arith.constant 0 : i32
    %c0_i32_0 = arith.constant 0 : i32
    %c0_i32_1 = arith.constant 0 : i32
    return %arg0, %c0_i32, %c0_i32_0 : i32, i32, i32
  }
}

</mosaic_0001>

<llo_original>
// kernel: tpu_custom_call.1
$region0: #{tpu_custom_call.1}
  #allocation0 [shape = 'u32[]', space=smem, size = 0x4, offset = 0x4, fixed_abs, tag = 'smem constant byte address 0x4 - core index']
  #allocation1 [shape = 'u32[144,128]{1,0:T(1,128)}', space=vmem, size = 0x12000, scoped, tag = 'internal scratch']
  %s0 = inlined_call_operand.vmem [shape: f32[8,36], index: 0, kind: input, shape index: {}]
  %s1 = inlined_call_operand.vmem [shape: s32[8,4], index: 1, kind: input, shape index: {}]
  %s2 = inlined_call_operand.hbm [shape: f32[1,1,128], index: 2, kind: output, shape index: {}]
  %s3 = sld [smem:[#allocation0]]
  $region18: #{tpu_custom_call.1} parent=0
    _
  %s5 = ssub.s32 1, %s3
  %s6 = scalar_select 0, %s5, %s3
  $region1: #{tpu_custom_call.1} parent=0
    #allocation2 [shape = 'u8[512]{0}', space=vmem, size = 0x400, scoped, tag = 'output window, operand 0, single buffered']
    #allocation3 [shape = 's32[1]{0}', space=sflag, size = 0x4, scoped, tag = 'scoped memory for tpu_custom_call.1']
    %7 = vsyncpa [#allocation3], 0
    // Predicated region
    $region2: #{tpu_custom_call.1} parent=1 // pred_check
      _
    $region3: #{tpu_custom_call.1} parent=1 // pred_check_branch
      %9 = sbr.rel (0) target = $region5
    $region4: #{tpu_custom_call.1} parent=1 // pred_region
      _
    $region5: #{tpu_custom_call.1} parent=1 // pred_fallthru
      _
    // Predicated region
    $region6: #{tpu_custom_call.1} parent=1 // pred_check
      _
    $region7: #{tpu_custom_call.1} parent=1 // pred_check_branch
      %11 = sbr.rel (0) target = $region9
    $region8: #{tpu_custom_call.1} parent=1 // pred_region
      _
    $region9: #{tpu_custom_call.1} parent=1 // pred_fallthru
      _
    %v12 = vld [vmem:[%s0] sm:$0xff]
    %v13 = vld [vmem:[%s1] sm:$0xff]
    %v14 = vlaneseq
    %v15 = vand.u32 %v14, 127
    %v16 = vlaneseq
    %v17 = vshrl.u32 %v16, 7
    %s18 = smul.u32 0, 8
    %v19 = vstv %s18
    %v20 = vadd.s32 %v17, %v19
    %vm21 = vcmp.lt.s32.totalorder %v20, 8
    %vm22 = vcmp.ge.s32.totalorder %v15, 0
    %vm23 = vcmp.lt.s32.totalorder %v15, 6
    %vm24 = vmand %vm22, %vm23
    %v25 = vsel %vm24, %v12, -1e+30
    %vm26 = vcmask 293888
    %v27 = vsel %vm26, %v25, -inf
    %28 = vmax.xlane.f32.xlu0 %v27
    %v29 = vpop.xlane.xlu0 %28
    %v30 = vsub.f32 %v25, %v29
    %v31 = vmul.f32 %v30, 1.442695
    %v32 = vpow.pop %v31
    %v33 = vsel %vm26, %v32, 0.0
    %34 = vadd.xlane.f32.xlu0 %v33
    %v35 = vpop.xlane.xlu0 %34
    %v36 = vlog2.pop %v35
    %v37 = vmul.f32 %v36, 0.6931472
    %v38 = vadd.f32 %v37, %v29
    %39 = vset.pattern.permute.xlu0 0
    %40 = vperm.xlu0 %39, %v13
    %v41 = vpop.permute.xlu0 %40
    %vm42 = vcmp.eq.s32.totalorder %v15, %v41
    %v43 = vsel %vm42, %v12, 0.0
    %v44 = vsel %vm26, %v43, 0.0
    %45 = vadd.xlane.f32.xlu0 %v44
    %v46 = vpop.xlane.xlu0 %45
    %v47 = vsub.f32 %v38, %v46
    %v48 = vsel %vm21, %v47, 0.0
    %vm49 = vcmask 7168
    %v50 = vsel %vm49, %v48, 0.0
    %51 = vadd.xlane.f32.xlu0 %v50
    %v52 = vpop.xlane.xlu0 %51
    %v53 = vrot.slane %v52, 4
    %v54 = vadd.f32 %v52, %v53
    %v55 = vrot.slane %v54, 2
    %v56 = vadd.f32 %v54, %v55
    %v57 = vrot.slane %v56, 1
    %v58 = vadd.f32 %v56, %v57
    %s59 = vtos %v58
    %s60 = sadd.f32 %s59, 0.0
    %vm61 = vcmp.ge.s32.totalorder %v15, 6
    %vm62 = vcmp.lt.s32.totalorder %v15, 16
    %vm63 = vmand %vm61, %vm62
    %v64 = vsel %vm63, %v12, -1e+30
    %v65 = vsel %vm26, %v64, -inf
    %66 = vmax.xlane.f32.xlu0 %v65
    %v67 = vpop.xlane.xlu0 %66
    %v68 = vsub.f32 %v64, %v67
    %v69 = vmul.f32 %v68, 1.442695
    %v70 = vpow.pop %v69
    %v71 = vsel %vm26, %v70, 0.0
    %72 = vadd.xlane.f32.xlu0 %v71
    %v73 = vpop.xlane.xlu0 %72
    %v74 = vlog2.pop %v73
    %v75 = vmul.f32 %v74, 0.6931472
    %v76 = vadd.f32 %v75, %v67
    %v77 = vadd.s32 %v13, 6
    %78 = vset.pattern.permute.xlu0 1
    %79 = vperm.xlu0 %78, %v77
    %v80 = vpop.permute.xlu0 %79
    %vm81 = vcmp.eq.s32.totalorder %v15, %v80
    %v82 = vsel %vm81, %v12, 0.0
    %v83 = vsel %vm26, %v82, 0.0
    %84 = vadd.xlane.f32.xlu0 %v83
    %v85 = vpop.xlane.xlu0 %84
    %v86 = vsub.f32 %v76, %v85
    %v87 = vsel %vm21, %v86, 0.0
    %v88 = vsel %vm49, %v87, 0.0
    %89 = vadd.xlane.f32.xlu0 %v88
    %v90 = vpop.xlane.xlu0 %89
    %v91 = vrot.slane %v90, 4
    %v92 = vadd.f32 %v90, %v91
    %v93 = vrot.slane %v92, 2
    %v94 = vadd.f32 %v92, %v93
    %v95 = vrot.slane %v94, 1
    %v96 = vadd.f32 %v94, %v95
    %s97 = vtos %v96
    %s98 = sadd.f32 %s60, %s97
    %vm99 = vcmp.ge.s32.totalorder %v15, 16
    %vm100 = vcmp.lt.s32.totalorder %v15, 28
    %vm101 = vmand %vm99, %vm100
    %v102 = vsel %vm101, %v12, -1e+30
    %v103 = vsel %vm26, %v102, -inf
    %104 = vmax.xlane.f32.xlu0 %v103
    %v105 = vpop.xlane.xlu0 %104
    %v106 = vsub.f32 %v102, %v105
    %v107 = vmul.f32 %v106, 1.442695
    %v108 = vpow.pop %v107
    %v109 = vsel %vm26, %v108, 0.0
    %110 = vadd.xlane.f32.xlu0 %v109
    %v111 = vpop.xlane.xlu0 %110
    %v112 = vlog2.pop %v111
    %v113 = vmul.f32 %v112, 0.6931472
    %v114 = vadd.f32 %v113, %v105
    %v115 = vadd.s32 %v13, 16
    %116 = vset.pattern.permute.xlu0 2
    %117 = vperm.xlu0 %116, %v115
    %v118 = vpop.permute.xlu0 %117
    %vm119 = vcmp.eq.s32.totalorder %v15, %v118
    %v120 = vsel %vm119, %v12, 0.0
    %v121 = vsel %vm26, %v120, 0.0
    %122 = vadd.xlane.f32.xlu0 %v121
    %v123 = vpop.xlane.xlu0 %122
    %v124 = vsub.f32 %v114, %v123
    %v125 = vsel %vm21, %v124, 0.0
    %v126 = vsel %vm49, %v125, 0.0
    %127 = vadd.xlane.f32.xlu0 %v126
    %v128 = vpop.xlane.xlu0 %127
    %v129 = vrot.slane %v128, 4
    %v130 = vadd.f32 %v128, %v129
    %v131 = vrot.slane %v130, 2
    %v132 = vadd.f32 %v130, %v131
    %v133 = vrot.slane %v132, 1
    %v134 = vadd.f32 %v132, %v133
    %s135 = vtos %v134
    %s136 = sadd.f32 %s98, %s135
    %vm137 = vcmp.ge.s32.totalorder %v15, 28
    %vm138 = vcmp.lt.s32.totalorder %v15, 36
    %vm139 = vmand %vm137, %vm138
    %v140 = vsel %vm139, %v12, -1e+30
    %v141 = vsel %vm26, %v140, -inf
    %142 = vmax.xlane.f32.xlu0 %v141
    %v143 = vpop.xlane.xlu0 %142
    %v144 = vsub.f32 %v140, %v143
    %v145 = vmul.f32 %v144, 1.442695
    %v146 = vpow.pop %v145
    %v147 = vsel %vm26, %v146, 0.0
    %148 = vadd.xlane.f32.xlu0 %v147
    %v149 = vpop.xlane.xlu0 %148
    %v150 = vlog2.pop %v149
    %v151 = vmul.f32 %v150, 0.6931472
    %v152 = vadd.f32 %v151, %v143
    %v153 = vadd.s32 %v13, 28
    %154 = vset.pattern.permute.xlu0 3
    %155 = vperm.xlu0 %154, %v153
    %v156 = vpop.permute.xlu0 %155
    %vm157 = vcmp.eq.s32.totalorder %v15, %v156
    %v158 = vsel %vm157, %v12, 0.0
    %v159 = vsel %vm26, %v158, 0.0
    %160 = vadd.xlane.f32.xlu0 %v159
    %v161 = vpop.xlane.xlu0 %160
    %v162 = vsub.f32 %v152, %v161
    %v163 = vsel %vm21, %v162, 0.0
    %v164 = vsel %vm49, %v163, 0.0
    %165 = vadd.xlane.f32.xlu0 %v164
    %v166 = vpop.xlane.xlu0 %165
    %v167 = vrot.slane %v166, 4
    %v168 = vadd.f32 %v166, %v167
    %v169 = vrot.slane %v168, 2
    %v170 = vadd.f32 %v168, %v169
    %v171 = vrot.slane %v170, 1
    %v172 = vadd.f32 %v170, %v171
    %s173 = vtos %v172
    %s174 = sadd.f32 %s136, %s173
    %v175 = vstv %s174
    %176 = vst [vmem:[#allocation2] sm:$0x1] %v175
    // Predicated region
    $region10: #{tpu_custom_call.1} parent=1 // pred_check
      _
    $region11: #{tpu_custom_call.1} parent=1 // pred_check_branch
      %178 = sbr.rel (0) target = $region13
    $region12: #{tpu_custom_call.1} parent=1 // pred_region
      %s180 = ssub.s32 16, 16
      %181 = vsyncadd [#allocation3], %s180
      %s183 = sshll.u32 [#allocation2], 4
      %s184 = int_to_ptr.vmem [resolvable:$true] %s183
      %186 = dma.vmem_to_hbm [thread:$0]  %s184, 16, %s2, [#allocation3]
    $region13: #{tpu_custom_call.1} parent=1 // pred_fallthru
      _
    // Predicated region
    $region14: #{tpu_custom_call.1} parent=1 // pred_check
      _
    $region15: #{tpu_custom_call.1} parent=1 // pred_check_branch
      %188 = sbr.rel (0) target = $region17
    $region16: #{tpu_custom_call.1} parent=1 // pred_region
      %189 = dma.done [#allocation3], 16
    $region17: #{tpu_custom_call.1} parent=1 // pred_fallthru
      _
    %190 = vsyncpa [#allocation3], 1

</llo_original>
